<compile_context>
chip_gen: v5e
topology: v5e:2x2
jax: 0.10.0
libtpu: 0.0.40
codegen_flags: <defaults>
</compile_context>

<pallas_src>
import functools

import jax
import jax.numpy as jnp
import numpy as np
from jax.experimental import pallas as pl
from jax.experimental.pallas import tpu as pltpu


# VMEM budget for the double-buffered input blocks (2 inputs x 2 buffers).
_INPUT_VMEM_BUDGET = 16 * 1024 * 1024
# Scoped VMEM limit requested from the compiler: fits v5e/v6e (128 MiB
# physical) and leaves ~50% headroom on v7x's 64 MiB.
_VMEM_LIMIT_BYTES = 32 * 1024 * 1024


def _round_up(a, b):
    return (a + b - 1) // b * b


def _inner_product_decoder_kernel(xs_ref, xd_ref, out_ref, *, group):
    """Per-edge inner product + sigmoid + 1e-15 over one tile.

    xs_ref/xd_ref: (R, LANES) gathered source/dest features; each row packs
                   k = LANES // group edges of `group` features each.
    out_ref:       (R, k) per-edge probabilities.
    """
    xs = xs_ref[...].astype(jnp.float32)
    xd = xd_ref[...].astype(jnp.float32)
    prod = xs * xd                                   # (R, LANES), VPU
    rows, lanes = prod.shape
    k = lanes // group

    if k == 1:
        logits = jnp.sum(prod, axis=-1, keepdims=True)            # (R, 1)
    else:
        # Grouped lane reduction: per packed edge j, sum lanes
        # [j*group, (j+1)*group).  Built from masked full-lane sums and a
        # broadcast select — all plain VPU/XLU ops, f32-exact.
        lane_id = jax.lax.broadcasted_iota(jnp.int32, (rows, lanes), 1)
        col_id = jax.lax.broadcasted_iota(jnp.int32, (rows, k), 1)
        logits = jnp.zeros((rows, k), jnp.float32)
        for j in range(k):                           # static unroll, k <= 16
            in_group = (lane_id >= j * group) & (lane_id < (j + 1) * group)
            s_j = jnp.sum(jnp.where(in_group, prod, jnp.float32(0.0)),
                          axis=-1, keepdims=True)    # (R, 1)
            logits = logits + jnp.where(col_id == j, s_j, jnp.float32(0.0))

    out_ref[...] = jax.nn.sigmoid(logits) + jnp.float32(1e-15)


@jax.jit
def decoder_forward(x, edge_index):
    """Pallas version of Decoder.forward.

    Args:
      x:          [N, D] float node embeddings (f32 or bf16).
      edge_index: [2, E] integer edge list.
    Returns:
      (adj_pred [E] float32, edge_index).
    """
    N, D = x.shape
    E = edge_index.shape[1]

    if E == 0:  # static shape guard: pallas_call with an empty grid
        return jnp.zeros((0,), jnp.float32), edge_index

    in_dtype = x.dtype
    itemsize = jnp.dtype(in_dtype).itemsize
    sublane = {4: 8, 2: 16, 1: 32}.get(itemsize, 8)

    # --- feature packing / padding (applied once to the small [N, D] array) --
    if 0 < D < 128 and 128 % D == 0:
        k = 128 // D          # pack k edges per 128-lane row, no zero padding
        lanes = 128
        group = D
        x_feat = x
    else:
        k = 1
        lanes = max(128, _round_up(D, 128))
        group = lanes
        x_feat = jnp.pad(x, ((0, 0), (0, lanes - D)))

    # --- tile sizing from a VMEM byte budget ---------------------------------
    rows_needed = -(-E // k)                                   # ceil(E / k)
    bytes_per_row = lanes * itemsize
    max_rows = max(
        sublane,
        (_INPUT_VMEM_BUDGET // (4 * bytes_per_row)) // sublane * sublane,
    )
    tile_rows = min(max_rows, _round_up(rows_needed, sublane))
    rows_pad = _round_up(rows_needed, tile_rows)
    e_pad = rows_pad * k

    # --- pad the index vectors (not the gathered features) -------------------
    src = jnp.pad(edge_index[0].astype(jnp.int32), (0, e_pad - E))
    dst = jnp.pad(edge_index[1].astype(jnp.int32), (0, e_pad - E))

    # --- glue: endpoint gather (XLA row gather) + free packing reshape -------
    xs = jnp.take(x_feat, src, axis=0).reshape(rows_pad, lanes)
    xd = jnp.take(x_feat, dst, axis=0).reshape(rows_pad, lanes)

    grid = (rows_pad // tile_rows,)
    out = pl.pallas_call(
        functools.partial(_inner_product_decoder_kernel, group=group),
        out_shape=jax.ShapeDtypeStruct((rows_pad, k), jnp.float32),
        grid=grid,
        in_specs=[
            pl.BlockSpec((tile_rows, lanes), lambda i: (i, 0)),
            pl.BlockSpec((tile_rows, lanes), lambda i: (i, 0)),
        ],
        out_specs=pl.BlockSpec((tile_rows, k), lambda i: (i, 0)),
        compiler_params=pltpu.CompilerParams(
            dimension_semantics=("parallel",),
            vmem_limit_bytes=_VMEM_LIMIT_BYTES,
        ),
    )(xs, xd)

    adj_pred = out.reshape(rows_pad * k)[:E]                   # drop padding
    return adj_pred, edge_index


if __name__ == "__main__":
    key = jax.random.PRNGKey(0)
    k_x, k_e = jax.random.split(key)

    N, D, E = 8, 32, 16                                        # small graph
    x = jax.random.normal(k_x, (N, D), dtype=jnp.float32)
    edge_index = jax.random.randint(k_e, (2, E), 0, N, dtype=jnp.int32)

    adj_pred, edge_index_out = decoder_forward(x, edge_index)
    jax.block_until_ready(adj_pred)

    # Reference (pure JAX, same semantics as torch_geometric's
    # InnerProductDecoder with sigmoid=True, plus 1e-15).
    ref = jax.nn.sigmoid(
        jnp.sum(x[edge_index[0]] * x[edge_index[1]], axis=1)
    ) + 1e-15
    np.testing.assert_allclose(np.asarray(adj_pred), np.asarray(ref),
                               rtol=1e-5, atol=1e-6)
    assert adj_pred.shape == (E,)
    assert edge_index_out.shape == (2, E)

    print("KERNEL_OK")
</pallas_src>

<mosaic_0001>
module attributes {stable_mosaic.version = 11 : i64} {
  func.func @_inner_product_decoder_kernel(%arg0: i32, %arg1: memref<8x128xf32, #tpu.memory_space<vmem>>, %arg2: memref<8x128xf32, #tpu.memory_space<vmem>>, %arg3: memref<8x4xf32, #tpu.memory_space<vmem>>) attributes {dimension_semantics = [#tpu.dimension_semantics<parallel>], iteration_bounds = array<i64: 1>, scalar_prefetch = 0 : i64, scratch_operands = 0 : i64, tpu.core_type = #tpu.core_type<tc>, window_params = [{transform_indices = @transform_0, window_bounds = array<i64: 8, 128>}, {transform_indices = @transform_1, window_bounds = array<i64: 8, 128>}, {transform_indices = @transform_2, window_bounds = array<i64: 8, 4>}]} {
    %c0 = arith.constant 0 : index
    %c0_0 = arith.constant 0 : index
    %0 = vector.load %arg1[%c0, %c0_0] : memref<8x128xf32, #tpu.memory_space<vmem>>, vector<8x128xf32>
    %c0_1 = arith.constant 0 : index
    %c0_2 = arith.constant 0 : index
    %1 = vector.load %arg2[%c0_1, %c0_2] : memref<8x128xf32, #tpu.memory_space<vmem>>, vector<8x128xf32>
    %2 = arith.mulf %0, %1 : vector<8x128xf32>
    %3 = tpu.iota {dimensions = array<i32: 1>} : vector<8x128xi32>
    %4 = tpu.iota {dimensions = array<i32: 1>} : vector<8x4xi32>
    %cst = arith.constant 0.000000e+00 : f32
    %5 = vector.broadcast %cst : f32 to vector<8x4xf32>
    %c0_i32 = arith.constant 0 : i32
    %6 = vector.broadcast %c0_i32 : i32 to vector<8x128xi32>
    %7 = arith.cmpi sge, %3, %6 : vector<8x128xi32>
    %c32_i32 = arith.constant 32 : i32
    %8 = vector.broadcast %c32_i32 : i32 to vector<8x128xi32>
    %9 = arith.cmpi slt, %3, %8 : vector<8x128xi32>
    %10 = arith.andi %7, %9 : vector<8x128xi1>
    %cst_3 = arith.constant 0.000000e+00 : f32
    %11 = vector.broadcast %cst_3 : f32 to vector<8x128xf32>
    %12 = arith.select %10, %2, %11 : vector<8x128xi1>, vector<8x128xf32>
    %cst_4 = arith.constant dense<0.000000e+00> : vector<8xf32>
    %13 = vector.multi_reduction <add>, %12, %cst_4 [1] : vector<8x128xf32> to vector<8xf32>
    %14 = vector.shape_cast %13 : vector<8xf32> to vector<8x1xf32>
    %c0_i32_5 = arith.constant 0 : i32
    %15 = vector.broadcast %c0_i32_5 : i32 to vector<8x4xi32>
    %16 = arith.cmpi eq, %4, %15 : vector<8x4xi32>
    %cst_6 = arith.constant 0.000000e+00 : f32
    %17 = vector.shape_cast %14 : vector<8x1xf32> to vector<8x1xf32>
    %18 = vector.broadcast %17 : vector<8x1xf32> to vector<8x4xf32>
    %19 = vector.broadcast %cst_6 : f32 to vector<8x4xf32>
    %20 = arith.select %16, %18, %19 : vector<8x4xi1>, vector<8x4xf32>
    %21 = arith.addf %5, %20 : vector<8x4xf32>
    %c32_i32_7 = arith.constant 32 : i32
    %22 = vector.broadcast %c32_i32_7 : i32 to vector<8x128xi32>
    %23 = arith.cmpi sge, %3, %22 : vector<8x128xi32>
    %c64_i32 = arith.constant 64 : i32
    %24 = vector.broadcast %c64_i32 : i32 to vector<8x128xi32>
    %25 = arith.cmpi slt, %3, %24 : vector<8x128xi32>
    %26 = arith.andi %23, %25 : vector<8x128xi1>
    %cst_8 = arith.constant 0.000000e+00 : f32
    %27 = vector.broadcast %cst_8 : f32 to vector<8x128xf32>
    %28 = arith.select %26, %2, %27 : vector<8x128xi1>, vector<8x128xf32>
    %cst_9 = arith.constant dense<0.000000e+00> : vector<8xf32>
    %29 = vector.multi_reduction <add>, %28, %cst_9 [1] : vector<8x128xf32> to vector<8xf32>
    %30 = vector.shape_cast %29 : vector<8xf32> to vector<8x1xf32>
    %c1_i32 = arith.constant 1 : i32
    %31 = vector.broadcast %c1_i32 : i32 to vector<8x4xi32>
    %32 = arith.cmpi eq, %4, %31 : vector<8x4xi32>
    %cst_10 = arith.constant 0.000000e+00 : f32
    %33 = vector.shape_cast %30 : vector<8x1xf32> to vector<8x1xf32>
    %34 = vector.broadcast %33 : vector<8x1xf32> to vector<8x4xf32>
    %35 = vector.broadcast %cst_10 : f32 to vector<8x4xf32>
    %36 = arith.select %32, %34, %35 : vector<8x4xi1>, vector<8x4xf32>
    %37 = arith.addf %21, %36 : vector<8x4xf32>
    %c64_i32_11 = arith.constant 64 : i32
    %38 = vector.broadcast %c64_i32_11 : i32 to vector<8x128xi32>
    %39 = arith.cmpi sge, %3, %38 : vector<8x128xi32>
    %c96_i32 = arith.constant 96 : i32
    %40 = vector.broadcast %c96_i32 : i32 to vector<8x128xi32>
    %41 = arith.cmpi slt, %3, %40 : vector<8x128xi32>
    %42 = arith.andi %39, %41 : vector<8x128xi1>
    %cst_12 = arith.constant 0.000000e+00 : f32
    %43 = vector.broadcast %cst_12 : f32 to vector<8x128xf32>
    %44 = arith.select %42, %2, %43 : vector<8x128xi1>, vector<8x128xf32>
    %cst_13 = arith.constant dense<0.000000e+00> : vector<8xf32>
    %45 = vector.multi_reduction <add>, %44, %cst_13 [1] : vector<8x128xf32> to vector<8xf32>
    %46 = vector.shape_cast %45 : vector<8xf32> to vector<8x1xf32>
    %c2_i32 = arith.constant 2 : i32
    %47 = vector.broadcast %c2_i32 : i32 to vector<8x4xi32>
    %48 = arith.cmpi eq, %4, %47 : vector<8x4xi32>
    %cst_14 = arith.constant 0.000000e+00 : f32
    %49 = vector.shape_cast %46 : vector<8x1xf32> to vector<8x1xf32>
    %50 = vector.broadcast %49 : vector<8x1xf32> to vector<8x4xf32>
    %51 = vector.broadcast %cst_14 : f32 to vector<8x4xf32>
    %52 = arith.select %48, %50, %51 : vector<8x4xi1>, vector<8x4xf32>
    %53 = arith.addf %37, %52 : vector<8x4xf32>
    %c96_i32_15 = arith.constant 96 : i32
    %54 = vector.broadcast %c96_i32_15 : i32 to vector<8x128xi32>
    %55 = arith.cmpi sge, %3, %54 : vector<8x128xi32>
    %c128_i32 = arith.constant 128 : i32
    %56 = vector.broadcast %c128_i32 : i32 to vector<8x128xi32>
    %57 = arith.cmpi slt, %3, %56 : vector<8x128xi32>
    %58 = arith.andi %55, %57 : vector<8x128xi1>
    %cst_16 = arith.constant 0.000000e+00 : f32
    %59 = vector.broadcast %cst_16 : f32 to vector<8x128xf32>
    %60 = arith.select %58, %2, %59 : vector<8x128xi1>, vector<8x128xf32>
    %cst_17 = arith.constant dense<0.000000e+00> : vector<8xf32>
    %61 = vector.multi_reduction <add>, %60, %cst_17 [1] : vector<8x128xf32> to vector<8xf32>
    %62 = vector.shape_cast %61 : vector<8xf32> to vector<8x1xf32>
    %c3_i32 = arith.constant 3 : i32
    %63 = vector.broadcast %c3_i32 : i32 to vector<8x4xi32>
    %64 = arith.cmpi eq, %4, %63 : vector<8x4xi32>
    %cst_18 = arith.constant 0.000000e+00 : f32
    %65 = vector.shape_cast %62 : vector<8x1xf32> to vector<8x1xf32>
    %66 = vector.broadcast %65 : vector<8x1xf32> to vector<8x4xf32>
    %67 = vector.broadcast %cst_18 : f32 to vector<8x4xf32>
    %68 = arith.select %64, %66, %67 : vector<8x4xi1>, vector<8x4xf32>
    %69 = arith.addf %53, %68 : vector<8x4xf32>
    %70 = arith.negf %69 : vector<8x4xf32>
    %71 = math.exp %70 : vector<8x4xf32>
    %cst_19 = arith.constant 1.000000e+00 : f32
    %72 = vector.broadcast %cst_19 : f32 to vector<8x4xf32>
    %73 = arith.addf %72, %71 : vector<8x4xf32>
    %74 = arith.divf %72, %73 : vector<8x4xf32>
    %cst_20 = arith.constant 1.000000e-15 : f32
    %75 = vector.broadcast %cst_20 : f32 to vector<8x4xf32>
    %76 = arith.addf %74, %75 : vector<8x4xf32>
    %c0_21 = arith.constant 0 : index
    %c0_22 = arith.constant 0 : index
    %77 = vector.load %arg3[%c0_21, %c0_22] : memref<8x4xf32, #tpu.memory_space<vmem>>, vector<8x4xf32>
    tpu.vector_store %arg3[%c0_21, %c0_22], %76 {strides = array<i32>} : memref<8x4xf32, #tpu.memory_space<vmem>>, vector<8x4xf32>,
    return
  }
  func.func @transform_0(%arg0: i32) -> (i32, i32) {
    %c0_i32 = arith.constant 0 : i32
    %c0_i32_0 = arith.constant 0 : i32
    return %arg0, %c0_i32 : i32, i32
  }
  func.func @transform_1(%arg0: i32) -> (i32, i32) {
    %c0_i32 = arith.constant 0 : i32
    %c0_i32_0 = arith.constant 0 : i32
    return %arg0, %c0_i32 : i32, i32
  }
  func.func @transform_2(%arg0: i32) -> (i32, i32) {
    %c0_i32 = arith.constant 0 : i32
    %c0_i32_0 = arith.constant 0 : i32
    return %arg0, %c0_i32 : i32, i32
  }
}

</mosaic_0001>

<llo_original>
// kernel: decoder_forward.1
$region0: #{decoder_forward.1}
  #allocation0 [shape = 'u32[]', space=smem, size = 0x4, offset = 0x4, fixed_abs, tag = 'smem constant byte address 0x4 - core index']
  #allocation1 [shape = 'u32[72,128]{1,0:T(1,128)}', space=vmem, size = 0x9000, scoped, tag = 'internal scratch']
  %s0 = inlined_call_operand.vmem [shape: f32[8,128], index: 0, kind: input, shape index: {}]
  %s1 = inlined_call_operand.vmem [shape: f32[8,128], index: 1, kind: input, shape index: {}]
  %s2 = inlined_call_operand.vmem [shape: f32[8,4], index: 2, kind: output, shape index: {}]
  %s3 = sld [smem:[#allocation0]]
  $region18: #{decoder_forward.1} parent=0
    _
  %s5 = ssub.s32 1, %s3
  %s6 = scalar_select 0, %s5, %s3
  // Predicated region
  $region2: #{decoder_forward.1} parent=0 // pred_check
    _
  $region3: #{decoder_forward.1} parent=0 // pred_check_branch
    %8 = sbr.rel (0) target = $region5
  $region4: #{decoder_forward.1} parent=0 // pred_region
    _
  $region5: #{decoder_forward.1} parent=0 // pred_fallthru
    _
  // Predicated region
  $region6: #{decoder_forward.1} parent=0 // pred_check
    _
  $region7: #{decoder_forward.1} parent=0 // pred_check_branch
    %10 = sbr.rel (0) target = $region9
  $region8: #{decoder_forward.1} parent=0 // pred_region
    _
  $region9: #{decoder_forward.1} parent=0 // pred_fallthru
    _
  %v11 = vld [vmem:[%s0] sm:$0xff]
  %v12 = vld [vmem:[%s1] sm:$0xff]
  %v13 = vmul.f32 %v11, %v12
  %v14 = vlaneseq
  %v15 = vand.u32 %v14, 127
  %vm16 = vcmp.ge.s32.totalorder %v15, 0
  %vm17 = vcmp.lt.s32.totalorder %v15, 32
  %vm18 = vmand %vm16, %vm17
  %v19 = vsel %vm18, %v13, 0.0
  %20 = vadd.xlane.f32.xlu0 %v19
  %v21 = vpop.xlane.xlu0 %20
  %vm22 = vcmp.eq.s32.totalorder %v15, 0
  %v23 = vsel %vm22, %v21, 0.0
  %v24 = vadd.f32 %v23, 0.0
  %vm25 = vcmp.ge.s32.totalorder %v15, 32
  %vm26 = vcmp.lt.s32.totalorder %v15, 64
  %vm27 = vmand %vm25, %vm26
  %v28 = vsel %vm27, %v13, 0.0
  %29 = vadd.xlane.f32.xlu0 %v28
  %v30 = vpop.xlane.xlu0 %29
  %vm31 = vcmp.eq.s32.totalorder %v15, 1
  %v32 = vsel %vm31, %v30, 0.0
  %v33 = vadd.f32 %v24, %v32
  %vm34 = vcmp.ge.s32.totalorder %v15, 64
  %vm35 = vcmp.lt.s32.totalorder %v15, 96
  %vm36 = vmand %vm34, %vm35
  %v37 = vsel %vm36, %v13, 0.0
  %38 = vadd.xlane.f32.xlu0 %v37
  %v39 = vpop.xlane.xlu0 %38
  %vm40 = vcmp.eq.s32.totalorder %v15, 2
  %v41 = vsel %vm40, %v39, 0.0
  %v42 = vadd.f32 %v33, %v41
  %vm43 = vcmp.ge.s32.totalorder %v15, 96
  %vm44 = vcmp.lt.s32.totalorder %v15, 128
  %vm45 = vmand %vm43, %vm44
  %v46 = vsel %vm45, %v13, 0.0
  %47 = vadd.xlane.f32.xlu0 %v46
  %v48 = vpop.xlane.xlu0 %47
  %vm49 = vcmp.eq.s32.totalorder %v15, 3
  %v50 = vsel %vm49, %v48, 0.0
  %v51 = vadd.f32 %v42, %v50
  %v52 = vxor.u32 %v51, 2147483648
  %v53 = vmul.f32 %v52, 1.442695
  %v54 = vpow.pop %v53
  %v55 = vadd.f32 %v54, 1.0
  %v56 = vrcp.pop %v55
  %v57 = vmul.f32 %v55, %v56
  %v58 = vsub.f32 1.0, %v57
  %v59 = vmul.f32 %v56, %v58
  %v60 = vadd.f32 %v56, %v59
  %vm61 = vweird.f32 %v55
  %vm62 = vweird.f32 %v56
  %vm63 = vmor %vm61, %vm62
  %v64 = vsel %vm63, %v56, %v60
  %v65 = vand.u32 2147483647, %v55
  %vm66 = vcmp.eq.f32.partialorder %v65, 8.507059e+37
  %v67 = vand.u32 %v55, 2147483648
  %v68 = vor.u32 1.1754944e-38, %v67
  %v69 = vsel %vm66, %v68, %v64
  %v70 = vmul.f32 1.0, %v69
  %v71 = vadd.f32 %v70, 1e-15
  %vm72 = vcmask 31744
  %73 = vst.msk [vmem:[%s2] sm:$0xff] %vm72, %v71
  // Predicated region
  $region10: #{decoder_forward.1} parent=0 // pred_check
    _
  $region11: #{decoder_forward.1} parent=0 // pred_check_branch
    %75 = sbr.rel (0) target = $region13
  $region12: #{decoder_forward.1} parent=0 // pred_region
    _
  $region13: #{decoder_forward.1} parent=0 // pred_fallthru
    _
  // Predicated region
  $region14: #{decoder_forward.1} parent=0 // pred_check
    _
  $region15: #{decoder_forward.1} parent=0 // pred_check_branch
    %77 = sbr.rel (0) target = $region17
  $region16: #{decoder_forward.1} parent=0 // pred_region
    _
  $region17: #{decoder_forward.1} parent=0 // pred_fallthru
    _

</llo_original>
